<compile_context>
chip_gen: v7x
topology: tpu7x:2x2x1
jax: 0.10.0
libtpu: 0.0.40
codegen_flags: <defaults>
</compile_context>

<pallas_src>
import jax
import jax.numpy as jnp
from jax.experimental import pallas as pl
from jax.experimental.pallas import tpu as pltpu


def _mlp_kernel(x_ref, w1_ref, b1_ref, w2_ref, b2_ref, w3_ref, b3_ref, o_ref):
    # x_ref: (6, TB) -- batch on the lane axis (lane-dense).
    x = x_ref[...]

    # fc1 + ReLU: (10, 6) @ (6, TB) -> (10, TB); accumulate in f32.
    h1 = jnp.dot(w1_ref[...], x, preferred_element_type=jnp.float32)
    h1 = jnp.maximum(h1 + b1_ref[...], 0.0)

    # fc2 + ReLU: (20, 10) @ (10, TB) -> (20, TB).  Cast the activations to the
    # weight dtype so the bf16 path also uses a bf16 MXU push (no-op for f32).
    h2 = jnp.dot(w2_ref[...], h1.astype(w2_ref.dtype),
                 preferred_element_type=jnp.float32)
    h2 = jnp.maximum(h2 + b2_ref[...], 0.0)

    # fc3 + Sigmoid: 20 -> 1 projection on VPU/XLU (broadcast-mul + sublane
    # reduce) -- skips a third serial, heavily padded MXU push.  f32 epilogue.
    h3 = jnp.sum(h2 * w3_ref[...], axis=0, keepdims=True) + b3_ref[...]  # (1, TB)
    o_ref[...] = jax.nn.sigmoid(h3).astype(o_ref.dtype)


def _round_up(n, m):
    return (n + m - 1) // m * m


def _choose_tiling(B, *, max_tile=32768, min_tiles=2, min_split_tile=1024):
    """Pick (lane_tile, n_tiles, padded_B).

    - lane_tile is a multiple of 128 and <= ~max_tile (amortizes the ~0.35us
      per-grid-step overhead; ~0.75 MiB f32 input block at the default).
    - Tiles are balanced (tb ~= cdiv(B, n)) so padding waste is < 1 tile even
      when B is just over a tile boundary.
    - For large B we force >= min_tiles tiles so the "parallel" grid axis can
      be split across v7x's 2 TensorCores (no-op cost on single-TC v5e/v6e).
    """
    b128 = _round_up(max(B, 1), 128)
    n = -(-b128 // max_tile)                      # tiles needed for max_tile cap
    if b128 >= min_tiles * min_split_tile:
        n = max(n, min_tiles)                     # keep both v7x TCs busy
    tb = _round_up(-(-b128 // n), 128)            # balanced tile, 128-aligned
    n = -(-b128 // tb)
    return tb, n, n * tb


def action_conditioned_ff_t(x_t, params, *, max_tile=32768, min_tiles=2,
                            matmul_dtype=None):
    """Fast path.  x_t: (6, B) float -- batch already on the lane axis.

    Returns (1, B) float32.  No wrapper-side transpose; padding only happens
    (and only by < 1 tile) when B is not already a multiple of the lane tile.
    """
    F, B = x_t.shape
    assert F == 6, f"expected 6 input features, got {F}"

    w1, b1 = params["w1"], params["b1"]   # (10, 6),  (10, 1)
    w2, b2 = params["w2"], params["b2"]   # (20, 10), (20, 1)
    w3, b3 = params["w3"], params["b3"]   # (20, 1),  (1, 1)

    tb, n_tiles, b_pad = _choose_tiling(B, max_tile=max_tile, min_tiles=min_tiles)
    if b_pad != B:
        x_t = jnp.pad(x_t, ((0, 0), (0, b_pad - B)))

    # Optional reduced-precision MXU inputs (halves x/weight HBM+VMEM traffic;
    # biggest win on HBM-bound v5e/v6e).  Epilogue stays f32 in the kernel.
    if matmul_dtype is not None:
        x_t = x_t.astype(matmul_dtype)
        w1 = w1.astype(matmul_dtype)
        w2 = w2.astype(matmul_dtype)

    const = lambda a: pl.BlockSpec(a.shape, lambda i: (0, 0))

    out = pl.pallas_call(
        _mlp_kernel,
        out_shape=jax.ShapeDtypeStruct((1, b_pad), jnp.float32),
        grid=(n_tiles,),
        in_specs=[
            pl.BlockSpec((6, tb), lambda i: (0, i)),        # batch-tiled input
            const(w1), const(b1),                           # weights/biases:
            const(w2), const(b2),                           # constant index_map,
            const(w3), const(b3),                           # stay resident in VMEM
        ],
        out_specs=pl.BlockSpec((1, tb), lambda i: (0, i)),  # lane-dense output
        compiler_params=pltpu.CompilerParams(
            dimension_semantics=("parallel",),              # megacore / v7x 2-TC
            vmem_limit_bytes=48 * 1024 * 1024,              # headroom for big tiles
        ),
    )(x_t, w1, b1, w2, b2, w3, b3)

    return out[:, :B] if b_pad != B else out               # (1, B)


def action_conditioned_ff(x, params, **kwargs):
    """PyTorch-compatible signature: x (B, 6) -> (B, 1).

    NOTE: this path transposes x (an extra HBM read+write of the input).
    Performance-critical callers should keep activations in (6, B) layout and
    call action_conditioned_ff_t directly.
    """
    return action_conditioned_ff_t(x.T, params, **kwargs).T


def init_params(key):
    """Deterministic PyTorch-style Linear init, stored in kernel layout."""
    def linear(key, fan_in, fan_out):
        kw, kb = jax.random.split(key)
        bound = 1.0 / jnp.sqrt(fan_in)
        w = jax.random.uniform(kw, (fan_out, fan_in), jnp.float32, -bound, bound)
        b = jax.random.uniform(kb, (fan_out, 1), jnp.float32, -bound, bound)
        return w, b

    k1, k2, k3 = jax.random.split(key, 3)
    w1, b1 = linear(k1, 6, 10)      # (10, 6),  (10, 1)
    w2, b2 = linear(k2, 10, 20)     # (20, 10), (20, 1)
    w3, b3 = linear(k3, 20, 1)      # (1, 20),  (1, 1)
    # fc3 weight stored as (20, 1) so the kernel's VPU path broadcasts it
    # against (20, TB) without an in-kernel transpose.
    return {"w1": w1, "b1": b1, "w2": w2, "b2": b2, "w3": w3.T, "b3": b3}


def reference_forward(x, p):
    """Pure-JAX reference, x: (B, 6) -> (B, 1)."""
    h1 = jnp.maximum(x @ p["w1"].T + p["b1"].T, 0.0)
    h2 = jnp.maximum(h1 @ p["w2"].T + p["b2"].T, 0.0)
    return jax.nn.sigmoid(h2 @ p["w3"] + p["b3"].T)


if __name__ == "__main__":
    key = jax.random.PRNGKey(0)
    k_params, k_x = jax.random.split(key)
    params = init_params(k_params)

    # 1) PyTorch-compatible (B, 6) path, small batch.
    x = jax.random.normal(k_x, (8, 6), dtype=jnp.float32)
    out = jax.block_until_ready(action_conditioned_ff(x, params))
    ref = reference_forward(x, params)
    assert out.shape == (8, 1), out.shape
    assert jnp.allclose(out, ref, atol=1e-5, rtol=1e-5), (out, ref)

    # 2) Lane-dense fast path (6, B) with a ragged batch -> exercises the
    #    adaptive tile selection + minimal padding.
    x2_t = jax.random.normal(jax.random.fold_in(k_x, 1), (6, 300), jnp.float32)
    out2 = jax.block_until_ready(action_conditioned_ff_t(x2_t, params))
    ref2 = reference_forward(x2_t.T, params).T
    assert out2.shape == (1, 300), out2.shape
    assert jnp.allclose(out2, ref2, atol=1e-5, rtol=1e-5)

    # 3) bf16 MXU path (HBM-traffic optimization for v5e/v6e); loose tolerance.
    out3 = jax.block_until_ready(
        action_conditioned_ff_t(x2_t, params, matmul_dtype=jnp.bfloat16))
    assert jnp.all(jnp.isfinite(out3))
    assert jnp.allclose(out3, ref2, atol=5e-2, rtol=5e-2)

    # TODO(synk): the PyTorch module's `evaluate` (data loading / loss loop) is
    # host-side training utility code, not part of the forward pass kernel.
    print("KERNEL_OK")
</pallas_src>

<mosaic_0001>
module attributes {stable_mosaic.version = 11 : i64} {
  func.func @_mlp_kernel(%arg0: i32, %arg1: memref<6x128xf32, #tpu.memory_space<vmem>>, %arg2: memref<10x6xf32, #tpu.memory_space<vmem>>, %arg3: memref<10x1xf32, #tpu.memory_space<vmem>>, %arg4: memref<20x10xf32, #tpu.memory_space<vmem>>, %arg5: memref<20x1xf32, #tpu.memory_space<vmem>>, %arg6: memref<20x1xf32, #tpu.memory_space<vmem>>, %arg7: memref<1x1xf32, #tpu.memory_space<vmem>>, %arg8: memref<1x128xf32, #tpu.memory_space<vmem>>) attributes {dimension_semantics = [#tpu.dimension_semantics<parallel>], iteration_bounds = array<i64: 1>, scalar_prefetch = 0 : i64, scratch_operands = 0 : i64, tpu.core_type = #tpu.core_type<tc>, window_params = [{transform_indices = @transform_0, window_bounds = array<i64: 6, 128>}, {pipeline_mode = #tpu.pipeline_mode<synchronous>, transform_indices = @transform_1, window_bounds = array<i64: 10, 6>}, {pipeline_mode = #tpu.pipeline_mode<synchronous>, transform_indices = @transform_2, window_bounds = array<i64: 10, 1>}, {pipeline_mode = #tpu.pipeline_mode<synchronous>, transform_indices = @transform_3, window_bounds = array<i64: 20, 10>}, {pipeline_mode = #tpu.pipeline_mode<synchronous>, transform_indices = @transform_4, window_bounds = array<i64: 20, 1>}, {pipeline_mode = #tpu.pipeline_mode<synchronous>, transform_indices = @transform_5, window_bounds = array<i64: 20, 1>}, {pipeline_mode = #tpu.pipeline_mode<synchronous>, transform_indices = @transform_6, window_bounds = array<i64: 1, 1>}, {transform_indices = @transform_7, window_bounds = array<i64: 1, 128>}]} {
    %c0 = arith.constant 0 : index
    %c0_0 = arith.constant 0 : index
    %0 = vector.load %arg1[%c0, %c0_0] : memref<6x128xf32, #tpu.memory_space<vmem>>, vector<6x128xf32>
    %c0_1 = arith.constant 0 : index
    %c0_2 = arith.constant 0 : index
    %1 = vector.load %arg2[%c0_1, %c0_2] : memref<10x6xf32, #tpu.memory_space<vmem>>, vector<10x6xf32>
    %cst = arith.constant dense<0.000000e+00> : vector<10x128xf32>
    %2 = tpu.matmul %1, %0, %cst {dimension_numbers = #tpu.dot_dimension_numbers<[1], [0], [0], [1], [0, 0, 1, 1], [], []>} : vector<10x6xf32>, vector<6x128xf32>, vector<10x128xf32> -> vector<10x128xf32>
    %c0_3 = arith.constant 0 : index
    %c0_4 = arith.constant 0 : index
    %3 = vector.load %arg3[%c0_3, %c0_4] : memref<10x1xf32, #tpu.memory_space<vmem>>, vector<10x1xf32>
    %4 = vector.broadcast %3 : vector<10x1xf32> to vector<10x128xf32>
    %5 = arith.addf %2, %4 : vector<10x128xf32>
    %cst_5 = arith.constant 0.000000e+00 : f32
    %6 = vector.broadcast %cst_5 : f32 to vector<10x128xf32>
    %7 = arith.maximumf %5, %6 : vector<10x128xf32>
    %c0_6 = arith.constant 0 : index
    %c0_7 = arith.constant 0 : index
    %8 = vector.load %arg4[%c0_6, %c0_7] : memref<20x10xf32, #tpu.memory_space<vmem>>, vector<20x10xf32>
    %cst_8 = arith.constant dense<0.000000e+00> : vector<20x128xf32>
    %9 = tpu.matmul %8, %7, %cst_8 {dimension_numbers = #tpu.dot_dimension_numbers<[1], [0], [0], [1], [0, 0, 1, 1], [], []>} : vector<20x10xf32>, vector<10x128xf32>, vector<20x128xf32> -> vector<20x128xf32>
    %c0_9 = arith.constant 0 : index
    %c0_10 = arith.constant 0 : index
    %10 = vector.load %arg5[%c0_9, %c0_10] : memref<20x1xf32, #tpu.memory_space<vmem>>, vector<20x1xf32>
    %11 = vector.broadcast %10 : vector<20x1xf32> to vector<20x128xf32>
    %12 = arith.addf %9, %11 : vector<20x128xf32>
    %cst_11 = arith.constant 0.000000e+00 : f32
    %13 = vector.broadcast %cst_11 : f32 to vector<20x128xf32>
    %14 = arith.maximumf %12, %13 : vector<20x128xf32>
    %c0_12 = arith.constant 0 : index
    %c0_13 = arith.constant 0 : index
    %15 = vector.load %arg6[%c0_12, %c0_13] : memref<20x1xf32, #tpu.memory_space<vmem>>, vector<20x1xf32>
    %16 = vector.broadcast %15 : vector<20x1xf32> to vector<20x128xf32>
    %17 = arith.mulf %14, %16 : vector<20x128xf32>
    %cst_14 = arith.constant dense<0.000000e+00> : vector<128xf32>
    %18 = vector.multi_reduction <add>, %17, %cst_14 [0] : vector<20x128xf32> to vector<128xf32>
    %19 = vector.shape_cast %18 : vector<128xf32> to vector<1x128xf32>
    %c0_15 = arith.constant 0 : index
    %c0_16 = arith.constant 0 : index
    %20 = vector.load %arg7[%c0_15, %c0_16] : memref<1x1xf32, #tpu.memory_space<vmem>>, vector<1x1xf32>
    %21 = vector.broadcast %20 : vector<1x1xf32> to vector<1x128xf32>
    %22 = arith.addf %19, %21 : vector<1x128xf32>
    %23 = arith.negf %22 : vector<1x128xf32>
    %24 = math.exp %23 : vector<1x128xf32>
    %cst_17 = arith.constant 1.000000e+00 : f32
    %25 = vector.broadcast %cst_17 : f32 to vector<1x128xf32>
    %26 = arith.addf %25, %24 : vector<1x128xf32>
    %27 = arith.divf %25, %26 : vector<1x128xf32>
    %c0_18 = arith.constant 0 : index
    %c0_19 = arith.constant 0 : index
    %28 = vector.load %arg8[%c0_18, %c0_19] : memref<1x128xf32, #tpu.memory_space<vmem>>, vector<1x128xf32>
    tpu.vector_store %arg8[%c0_18, %c0_19], %27 {strides = array<i32>} : memref<1x128xf32, #tpu.memory_space<vmem>>, vector<1x128xf32>,
    return
  }
  func.func @transform_0(%arg0: i32) -> (i32, i32) {
    %c0_i32 = arith.constant 0 : i32
    %c0_i32_0 = arith.constant 0 : i32
    return %c0_i32, %arg0 : i32, i32
  }
  func.func @transform_1(%arg0: i32) -> (i32, i32) {
    %c0_i32 = arith.constant 0 : i32
    %c0_i32_0 = arith.constant 0 : i32
    %c0_i32_1 = arith.constant 0 : i32
    return %c0_i32, %c0_i32_0 : i32, i32
  }
  func.func @transform_2(%arg0: i32) -> (i32, i32) {
    %c0_i32 = arith.constant 0 : i32
    %c0_i32_0 = arith.constant 0 : i32
    %c0_i32_1 = arith.constant 0 : i32
    return %c0_i32, %c0_i32_0 : i32, i32
  }
  func.func @transform_3(%arg0: i32) -> (i32, i32) {
    %c0_i32 = arith.constant 0 : i32
    %c0_i32_0 = arith.constant 0 : i32
    %c0_i32_1 = arith.constant 0 : i32
    return %c0_i32, %c0_i32_0 : i32, i32
  }
  func.func @transform_4(%arg0: i32) -> (i32, i32) {
    %c0_i32 = arith.constant 0 : i32
    %c0_i32_0 = arith.constant 0 : i32
    %c0_i32_1 = arith.constant 0 : i32
    return %c0_i32, %c0_i32_0 : i32, i32
  }
  func.func @transform_5(%arg0: i32) -> (i32, i32) {
    %c0_i32 = arith.constant 0 : i32
    %c0_i32_0 = arith.constant 0 : i32
    %c0_i32_1 = arith.constant 0 : i32
    return %c0_i32, %c0_i32_0 : i32, i32
  }
  func.func @transform_6(%arg0: i32) -> (i32, i32) {
    %c0_i32 = arith.constant 0 : i32
    %c0_i32_0 = arith.constant 0 : i32
    %c0_i32_1 = arith.constant 0 : i32
    return %c0_i32, %c0_i32_0 : i32, i32
  }
  func.func @transform_7(%arg0: i32) -> (i32, i32) {
    %c0_i32 = arith.constant 0 : i32
    %c0_i32_0 = arith.constant 0 : i32
    return %c0_i32, %arg0 : i32, i32
  }
}

</mosaic_0001>

<llo_original>
// kernel: tpu_custom_call.1
$region0: #{tpu_custom_call.1}
  #allocation0 [shape = 'u32[]', space=smem, size = 0x4, offset = 0x4, fixed_abs, tag = 'smem constant byte address 0x4 - core index']
  #allocation1 [shape = 'u32[144,128]{1,0:T(1,128)}', space=vmem, size = 0x12000, scoped, tag = 'internal scratch']
  #allocation2 [shape = 'f32[1,1]{1,0:T(1,128)S(1)}', space=vmem, size = 0x200, scoped, tag = 'scoped memory for tpu_custom_call.1']
  %s0 = inlined_call_operand.vmem [shape: f32[6,128], index: 0, kind: input, shape index: {}]
  %s1 = inlined_call_operand.vmem [shape: f32[10,6], index: 1, kind: input, shape index: {}]
  %s2 = inlined_call_operand.vmem [shape: f32[10,1], index: 2, kind: input, shape index: {}]
  %s3 = inlined_call_operand.vmem [shape: f32[20,10], index: 3, kind: input, shape index: {}]
  %s4 = inlined_call_operand.vmem [shape: f32[20,1], index: 4, kind: input, shape index: {}]
  %s5 = inlined_call_operand.vmem [shape: f32[20,1], index: 5, kind: input, shape index: {}]
  %s6 = inlined_call_operand.<no memory space> [shape: f32[1,1], index: 6, kind: input, shape index: {}]
  %s7 = inlined_call_operand.hbm [shape: f32[1,128], index: 7, kind: output, shape index: {}]
  %s8 = sld [smem:[#allocation0]]
  $region38: #{tpu_custom_call.1} parent=0
    _
  %s10 = ssub.s32 1, %s8
  %s11 = scalar_select 0, %s10, %s8
  %v12 = vstv %s6
  %13 = vst [vmem:[#allocation2] sm:$0x1] %v12
  $region1: #{tpu_custom_call.1} parent=0
    #allocation3 [shape = 'u8[512]{0}', space=vmem, size = 0x400, scoped, tag = 'output window, operand 0, single buffered']
    #allocation4 [shape = 's32[1]{0}', space=sflag, size = 0x4, scoped, tag = 'scoped memory for tpu_custom_call.1']
    %14 = vsyncpa [#allocation4], 0
    // Predicated region
    $region2: #{tpu_custom_call.1} parent=1 // pred_check
      _
    $region3: #{tpu_custom_call.1} parent=1 // pred_check_branch
      %16 = sbr.rel (0) target = $region5
    $region4: #{tpu_custom_call.1} parent=1 // pred_region
      _
    $region5: #{tpu_custom_call.1} parent=1 // pred_fallthru
      _
    // Predicated region
    $region6: #{tpu_custom_call.1} parent=1 // pred_check
      _
    $region7: #{tpu_custom_call.1} parent=1 // pred_check_branch
      %18 = sbr.rel (0) target = $region9
    $region8: #{tpu_custom_call.1} parent=1 // pred_region
      _
    $region9: #{tpu_custom_call.1} parent=1 // pred_fallthru
      _
    // Predicated region
    $region10: #{tpu_custom_call.1} parent=1 // pred_check
      _
    $region11: #{tpu_custom_call.1} parent=1 // pred_check_branch
      %20 = sbr.rel (0) target = $region13
    $region12: #{tpu_custom_call.1} parent=1 // pred_region
      _
    $region13: #{tpu_custom_call.1} parent=1 // pred_fallthru
      _
    // Predicated region
    $region14: #{tpu_custom_call.1} parent=1 // pred_check
      _
    $region15: #{tpu_custom_call.1} parent=1 // pred_check_branch
      %22 = sbr.rel (0) target = $region17
    $region16: #{tpu_custom_call.1} parent=1 // pred_region
      _
    $region17: #{tpu_custom_call.1} parent=1 // pred_fallthru
      _
    // Predicated region
    $region18: #{tpu_custom_call.1} parent=1 // pred_check
      _
    $region19: #{tpu_custom_call.1} parent=1 // pred_check_branch
      %24 = sbr.rel (0) target = $region21
    $region20: #{tpu_custom_call.1} parent=1 // pred_region
      _
    $region21: #{tpu_custom_call.1} parent=1 // pred_fallthru
      _
    // Predicated region
    $region22: #{tpu_custom_call.1} parent=1 // pred_check
      _
    $region23: #{tpu_custom_call.1} parent=1 // pred_check_branch
      %26 = sbr.rel (0) target = $region25
    $region24: #{tpu_custom_call.1} parent=1 // pred_region
      _
    $region25: #{tpu_custom_call.1} parent=1 // pred_fallthru
      _
    // Predicated region
    $region26: #{tpu_custom_call.1} parent=1 // pred_check
      _
    $region27: #{tpu_custom_call.1} parent=1 // pred_check_branch
      %28 = sbr.rel (0) target = $region29
    $region28: #{tpu_custom_call.1} parent=1 // pred_region
      _
    $region29: #{tpu_custom_call.1} parent=1 // pred_fallthru
      _
    %v29 = vld [vmem:[%s0] sm:$0x3f]
    %v30 = vld [vmem:[%s1] sm:$0xff]
    %v31 = vld [vmem:[%s1 + $0x8] sm:$0x3]
    %v32 = vld [vmem:[%s2] sm:$0xff]
    %v33 = vld [vmem:[%s2 + $0x8] sm:$0x3]
    %35 = vset.pattern.permute.xlu0 0
    %36 = vperm.xlu0 %35, %v32
    %v37 = vpop.permute.xlu0 %36
    %40 = vset.pattern.permute.xlu0 0
    %41 = vperm.xlu0 %40, %v33
    %v42 = vpop.permute.xlu0 %41
    %vm44 = vcmask 48128
    %v46 = vsel %vm44, %v30, 0
    %v49 = vsel %vm44, %v31, 0
    %vm51 = vcmask 1045504
    %v53 = vsel %vm51, %v29, 0
    %55 = vmatprep.subr.mxu0 0.0
    %56 = vmatpush1.msra.mxu0 %v53
    %57 = vmatprep.subr.mxu0 0.0
    %58 = vmatpush1.msra.mxu0 0.0
    %59 = vmatprep.subr.mxu0 0.0
    %60 = vmatpush1.msra.mxu0 0.0
    %61 = vmatprep.subr.mxu0 0.0
    %62 = vmatpush1.msra.mxu0 0.0
    %63 = vmatprep.subr.mxu0 0.0
    %64 = vmatpush1.msra.mxu0 0.0
    %65 = vmatprep.subr.mxu0 0.0
    %66 = vmatpush1.msra.mxu0 0.0
    %67 = vmatprep.subr.mxu0 0.0
    %68 = vmatpush1.msra.mxu0 0.0
    %69 = vmatprep.subr.mxu0 0.0
    %70 = vmatpush1.msra.mxu0 0.0
    %71 = vmatprep.subr.mxu0 0.0
    %72 = vmatpush1.msra.mxu0 0.0
    %73 = vmatprep.subr.mxu0 0.0
    %74 = vmatpush1.msra.mxu0 0.0
    %75 = vmatprep.subr.mxu0 0.0
    %76 = vmatpush1.msra.mxu0 0.0
    %77 = vmatprep.subr.mxu0 0.0
    %78 = vmatpush1.msra.mxu0 0.0
    %79 = vmatprep.subr.mxu0 0.0
    %80 = vmatpush1.msra.mxu0 0.0
    %81 = vmatprep.subr.mxu0 0.0
    %82 = vmatpush1.msra.mxu0 0.0
    %83 = vmatprep.subr.mxu0 0.0
    %84 = vmatpush1.msra.mxu0 0.0
    %85 = vmatprep.subr.mxu0 0.0
    %86 = vmatpush1.msra.mxu0 0.0
    %87 = vmatprep.subr.mxu0 0.0
    %88 = vmatpush1.msra.mxu0 0.0
    %89 = vmatprep.subr.mxu0 0.0
    %90 = vmatpush1.msra.mxu0 0.0
    %91 = vmatprep.subr.mxu0 0.0
    %92 = vmatpush1.msra.mxu0 0.0
    %93 = vmatprep.subr.mxu0 0.0
    %94 = vmatpush1.msra.mxu0 0.0
    %95 = vmatprep.subr.mxu0 0.0
    %96 = vmatpush1.msra.mxu0 0.0
    %97 = vmatprep.subr.mxu0 0.0
    %98 = vmatpush1.msra.mxu0 0.0
    %99 = vmatprep.subr.mxu0 0.0
    %100 = vmatpush1.msra.mxu0 0.0
    %101 = vmatprep.subr.mxu0 0.0
    %102 = vmatpush1.msra.mxu0 0.0
    %103 = vmatprep.subr.mxu0 0.0
    %104 = vmatpush1.msra.mxu0 0.0
    %105 = vmatprep.subr.mxu0 0.0
    %106 = vmatpush1.msra.mxu0 0.0
    %107 = vmatprep.subr.mxu0 0.0
    %108 = vmatpush1.msra.mxu0 0.0
    %109 = vmatprep.subr.mxu0 0.0
    %110 = vmatpush1.msra.mxu0 0.0
    %111 = vmatprep.subr.mxu0 0.0
    %112 = vmatpush1.msra.mxu0 0.0
    %113 = vmatprep.subr.mxu0 0.0
    %114 = vmatpush1.msra.mxu0 0.0
    %115 = vmatprep.subr.mxu0 0.0
    %116 = vmatpush1.msra.mxu0 0.0
    %117 = vmatprep.subr.mxu0 0.0
    %118 = vmatpush1.msra.mxu0 0.0
    %119 = vmatprep.mubr.f32.mxu0 0.0
    %120 = vmatmul.mubr.f32.gmra.mrb[0].mxu0 %v46
    %v121 = vpop.f32.mrb[0].mxu0
    %v122 = vadd.f32 %v37, %v121
    %v123 = vpop.f32.mrb[0].mxu0
    %124 = vmatprep.mubr.f32.mxu0 0.0
    %125 = vmatmul.mubr.f32.gmra.mrb[0].mxu0 %v49
    %v126 = vpop.f32.mrb[0].mxu0
    %v127 = vadd.f32 %v42, %v126
    %v128 = vpop.f32.mrb[0].mxu0
    %129 = vdwg.mxu0
    %v130 = vmax.f32 %v122, 0.0
    %v131 = vmax.f32 %v127, 0.0
    %v132 = vld [vmem:[%s3] sm:$0xff]
    %v133 = vld [vmem:[%s3 + $0x8] sm:$0xff]
    %v134 = vld [vmem:[%s3 + $0x10] sm:$0xf]
    %v135 = vld [vmem:[%s4] sm:$0xff]
    %v136 = vld [vmem:[%s4 + $0x8] sm:$0xff]
    %v137 = vld [vmem:[%s4 + $0x10] sm:$0xf]
    %139 = vset.pattern.permute.xlu0 0
    %140 = vperm.xlu0 %139, %v135
    %v141 = vpop.permute.xlu0 %140
    %144 = vset.pattern.permute.xlu0 0
    %145 = vperm.xlu0 %144, %v136
    %v146 = vpop.permute.xlu0 %145
    %149 = vset.pattern.permute.xlu0 0
    %150 = vperm.xlu0 %149, %v137
    %v151 = vpop.permute.xlu0 %150
    %vm153 = vcmask 80896
    %v155 = vsel %vm153, %v132, 0
    %v158 = vsel %vm153, %v133, 0
    %v161 = vsel %vm153, %v134, 0
    %vm163 = vcmask 1041408
    %v165 = vsel %vm163, %v131, 0
    %167 = vmatprep.subr.mxu0 0.0
    %168 = vmatpush1.msra.mxu0 %v130
    %169 = vmatprep.subr.mxu0 0.0
    %170 = vmatpush1.msra.mxu0 %v165
    %171 = vmatprep.subr.mxu0 0.0
    %172 = vmatpush1.msra.mxu0 0.0
    %173 = vmatprep.subr.mxu0 0.0
    %174 = vmatpush1.msra.mxu0 0.0
    %175 = vmatprep.subr.mxu0 0.0
    %176 = vmatpush1.msra.mxu0 0.0
    %177 = vmatprep.subr.mxu0 0.0
    %178 = vmatpush1.msra.mxu0 0.0
    %179 = vmatprep.subr.mxu0 0.0
    %180 = vmatpush1.msra.mxu0 0.0
    %181 = vmatprep.subr.mxu0 0.0
    %182 = vmatpush1.msra.mxu0 0.0
    %183 = vmatprep.subr.mxu0 0.0
    %184 = vmatpush1.msra.mxu0 0.0
    %185 = vmatprep.subr.mxu0 0.0
    %186 = vmatpush1.msra.mxu0 0.0
    %187 = vmatprep.subr.mxu0 0.0
    %188 = vmatpush1.msra.mxu0 0.0
    %189 = vmatprep.subr.mxu0 0.0
    %190 = vmatpush1.msra.mxu0 0.0
    %191 = vmatprep.subr.mxu0 0.0
    %192 = vmatpush1.msra.mxu0 0.0
    %193 = vmatprep.subr.mxu0 0.0
    %194 = vmatpush1.msra.mxu0 0.0
    %195 = vmatprep.subr.mxu0 0.0
    %196 = vmatpush1.msra.mxu0 0.0
    %197 = vmatprep.subr.mxu0 0.0
    %198 = vmatpush1.msra.mxu0 0.0
    %199 = vmatprep.subr.mxu0 0.0
    %200 = vmatpush1.msra.mxu0 0.0
    %201 = vmatprep.subr.mxu0 0.0
    %202 = vmatpush1.msra.mxu0 0.0
    %203 = vmatprep.subr.mxu0 0.0
    %204 = vmatpush1.msra.mxu0 0.0
    %205 = vmatprep.subr.mxu0 0.0
    %206 = vmatpush1.msra.mxu0 0.0
    %207 = vmatprep.subr.mxu0 0.0
    %208 = vmatpush1.msra.mxu0 0.0
    %209 = vmatprep.subr.mxu0 0.0
    %210 = vmatpush1.msra.mxu0 0.0
    %211 = vmatprep.subr.mxu0 0.0
    %212 = vmatpush1.msra.mxu0 0.0
    %213 = vmatprep.subr.mxu0 0.0
    %214 = vmatpush1.msra.mxu0 0.0
    %215 = vmatprep.subr.mxu0 0.0
    %216 = vmatpush1.msra.mxu0 0.0
    %217 = vmatprep.subr.mxu0 0.0
    %218 = vmatpush1.msra.mxu0 0.0
    %219 = vmatprep.subr.mxu0 0.0
    %220 = vmatpush1.msra.mxu0 0.0
    %221 = vmatprep.subr.mxu0 0.0
    %222 = vmatpush1.msra.mxu0 0.0
    %223 = vmatprep.subr.mxu0 0.0
    %224 = vmatpush1.msra.mxu0 0.0
    %225 = vmatprep.subr.mxu0 0.0
    %226 = vmatpush1.msra.mxu0 0.0
    %227 = vmatprep.subr.mxu0 0.0
    %228 = vmatpush1.msra.mxu0 0.0
    %229 = vmatprep.subr.mxu0 0.0
    %230 = vmatpush1.msra.mxu0 0.0
    %231 = vmatprep.mubr.f32.mxu0 0.0
    %232 = vmatmul.mubr.f32.gmra.mrb[0].mxu0 %v155
    %v233 = vpop.f32.mrb[0].mxu0
    %v234 = vadd.f32 %v141, %v233
    %v235 = vpop.f32.mrb[0].mxu0
    %236 = vmatprep.mubr.f32.mxu0 0.0
    %237 = vmatmul.mubr.f32.gmra.mrb[0].mxu0 %v158
    %v238 = vpop.f32.mrb[0].mxu0
    %v239 = vadd.f32 %v146, %v238
    %v240 = vpop.f32.mrb[0].mxu0
    %241 = vmatprep.mubr.f32.mxu0 0.0
    %242 = vmatmul.mubr.f32.gmra.mrb[0].mxu0 %v161
    %v243 = vpop.f32.mrb[0].mxu0
    %v244 = vadd.f32 %v151, %v243
    %v245 = vpop.f32.mrb[0].mxu0
    %246 = vdwg.mxu0
    %v247 = vmax.f32 %v234, 0.0
    %v248 = vmax.f32 %v239, 0.0
    %v249 = vmax.f32 %v244, 0.0
    %v250 = vld [vmem:[%s5] sm:$0xff]
    %v251 = vld [vmem:[%s5 + $0x8] sm:$0xff]
    %v252 = vld [vmem:[%s5 + $0x10] sm:$0xf]
    %254 = vset.pattern.permute.xlu0 0
    %255 = vperm.xlu0 %254, %v250
    %v256 = vpop.permute.xlu0 %255
    %259 = vset.pattern.permute.xlu0 0
    %260 = vperm.xlu0 %259, %v251
    %v261 = vpop.permute.xlu0 %260
    %264 = vset.pattern.permute.xlu0 0
    %265 = vperm.xlu0 %264, %v252
    %v266 = vpop.permute.xlu0 %265
    %v268 = vmul.f32 %v247, %v256
    %v269 = vmul.f32 %v248, %v261
    %v270 = vmul.f32 %v249, %v266
    %v271 = vadd.f32 %v268, %v269
    %vm272 = vcmask 1043456
    %v273 = vsel %vm272, %v270, 0.0
    %v274 = vadd.f32 %v271, %v273
    %v275 = vrot.slane %v274, 4
    %v276 = vadd.f32 %v274, %v275
    %v277 = vrot.slane %v276, 2
    %v278 = vadd.f32 %v276, %v277
    %v279 = vrot.slane %v278, 1
    %v280 = vadd.f32 %v278, %v279
    %v281 = vld [vmem:[#allocation2] sm:$0x1]
    %283 = vset.pattern.permute.xlu0 0
    %284 = vperm.xlu0 %283, %v281
    %v285 = vpop.permute.xlu0 %284
    %v287 = vlaneseq
    %v288 = vshrl.u32 %v287, 7
    %v289 = vsub.s32 0, %v288
    %v290 = vrot.slane %v285, %v289
    %v291 = vadd.f32 %v280, %v290
    %v292 = vxor.u32 %v291, 2147483648
    %v293 = vmul.f32 %v292, 1.442695
    %v294 = vpow.pop %v293
    %v295 = vadd.f32 %v294, 1.0
    %v296 = vrcp.pop %v295
    %v297 = vmul.f32 1.0, %v296
    %298 = vst [vmem:[#allocation3] sm:$0x1] %v297
    // Predicated region
    $region30: #{tpu_custom_call.1} parent=1 // pred_check
      _
    $region31: #{tpu_custom_call.1} parent=1 // pred_check_branch
      %300 = sbr.rel (0) target = $region33
    $region32: #{tpu_custom_call.1} parent=1 // pred_region
      %s302 = ssub.s32 16, 16
      %303 = vsyncadd [#allocation4], %s302
      %s305 = sshll.u32 [#allocation3], 4
      %s306 = int_to_ptr.vmem [resolvable:$true] %s305
      %308 = dma.vmem_to_hbm [thread:$0]  %s306, 16, %s7, [#allocation4]
    $region33: #{tpu_custom_call.1} parent=1 // pred_fallthru
      _
    // Predicated region
    $region34: #{tpu_custom_call.1} parent=1 // pred_check
      _
    $region35: #{tpu_custom_call.1} parent=1 // pred_check_branch
      %310 = sbr.rel (0) target = $region37
    $region36: #{tpu_custom_call.1} parent=1 // pred_region
      %311 = dma.done [#allocation4], 16
    $region37: #{tpu_custom_call.1} parent=1 // pred_fallthru
      _
    %312 = vsyncpa [#allocation4], 1

</llo_original>
